<compile_context>
chip_gen: v7x
topology: tpu7x:2x2x1
jax: 0.10.0
libtpu: 0.0.40
codegen_flags: <defaults>
</compile_context>

<pallas_src>
import math

import jax
import jax.numpy as jnp
from jax.experimental import pallas as pl
from jax.experimental.pallas import tpu as pltpu

IN_DIM = 28 * 28   # 784
HID_DIM = 64
OUT_DIM = 3
OUT_PAD = 128      # lane-dense padded output width (minimum lane-dense width)


def _round_up(n, m):
    return ((n + m - 1) // m) * m


def encoder_kernel(x_ref, w1_ref, b1_ref, w2_ref, b2_ref, o_ref):
    # First linear + ReLU (MXU matmul, f32 accumulation).
    h = jnp.dot(x_ref[...], w1_ref[...], preferred_element_type=jnp.float32)
    h = jnp.maximum(h + b1_ref[...], 0.0)          # (tb, 64) + (1, 64) broadcast
    # Second linear into a lane-dense (tb, 128) slab (cols 3..127 hit zero weights).
    out = jnp.dot(h, w2_ref[...], preferred_element_type=jnp.float32)
    o_ref[...] = (out + b2_ref[...]).astype(o_ref.dtype)


def encoder_forward(x, w1, b1, w2, b2, *, block_b=1024):
    """x: (B, 784) f32; w1: (784, 64); b1: (64,); w2: (64, 3); b2: (3,)."""
    B = x.shape[0]
    assert x.shape[1] == IN_DIM, x.shape

    # Effective batch tile: multiple of 8 (sublane), no larger than needed,
    # no larger than requested.  At 1024 rows the double-buffered x tile
    # (~6.4 MB) + (tb,128) output buffers (~1 MB) + resident weights (<0.5 MB)
    # fit comfortably inside the 32 MiB scoped-VMEM limit below and well under
    # v7x's 64 MiB physical VMEM; going bigger gives <1% (per measured tiling
    # sweep: 512 -> 85%, 1024 -> 86% of HBM roofline).
    eff_block = min(block_b, _round_up(B, 8))
    eff_block = max(8, (eff_block // 8) * 8)

    # Arbitrary batch sizes: pad rows with zeros, slice them off afterwards.
    # (No-op copy when B is already a multiple of the tile.)
    B_pad = _round_up(B, eff_block)
    if B_pad != B:
        x = jnp.pad(x, ((0, B_pad - B), (0, 0)))

    # Lane-dense output path: pad second-layer params out to 128 lanes.
    w2_pad = jnp.zeros((HID_DIM, OUT_PAD), w2.dtype).at[:, :OUT_DIM].set(w2)
    b2_pad = jnp.zeros((1, OUT_PAD), b2.dtype).at[:, :OUT_DIM].set(b2)
    b1_2d = b1.reshape(1, HID_DIM)

    grid = (B_pad // eff_block,)

    cost = pl.CostEstimate(
        flops=2 * B_pad * (IN_DIM * HID_DIM + HID_DIM * OUT_PAD),
        transcendentals=0,
        bytes_accessed=4 * (B_pad * IN_DIM + B_pad * OUT_PAD
                            + IN_DIM * HID_DIM + HID_DIM * OUT_PAD
                            + HID_DIM + OUT_PAD),
    )

    out_padded = pl.pallas_call(
        encoder_kernel,
        out_shape=jax.ShapeDtypeStruct((B_pad, OUT_PAD), jnp.float32),
        grid_spec=pltpu.PrefetchScalarGridSpec(
            num_scalar_prefetch=0,
            grid=grid,
            in_specs=[
                pl.BlockSpec((eff_block, IN_DIM), lambda i: (i, 0)),  # x tile (streamed)
                pl.BlockSpec((IN_DIM, HID_DIM), lambda i: (0, 0)),    # w1 (resident)
                pl.BlockSpec((1, HID_DIM), lambda i: (0, 0)),         # b1 (resident)
                pl.BlockSpec((HID_DIM, OUT_PAD), lambda i: (0, 0)),   # w2 padded (resident)
                pl.BlockSpec((1, OUT_PAD), lambda i: (0, 0)),         # b2 padded (resident)
            ],
            out_specs=pl.BlockSpec((eff_block, OUT_PAD), lambda i: (i, 0)),
        ),
        compiler_params=pltpu.CompilerParams(
            dimension_semantics=("parallel",),   # batch axis sharded across TCs on v7x
            vmem_limit_bytes=32 * 1024 * 1024,
        ),
        cost_estimate=cost,
    )(x, w1, b1_2d, w2_pad, b2_pad)

    # Drop row padding and the lane padding (cols 3..127).
    return out_padded[:B, :OUT_DIM]


def init_params(key):
    """Deterministic PyTorch-style (kaiming-uniform) init for both linears."""
    k1, k2, k3, k4 = jax.random.split(key, 4)
    bound1 = 1.0 / math.sqrt(IN_DIM)
    bound2 = 1.0 / math.sqrt(HID_DIM)
    # Stored as (in, out) so the kernel does x @ W (PyTorch stores (out, in)).
    w1 = jax.random.uniform(k1, (IN_DIM, HID_DIM), jnp.float32, -bound1, bound1)
    b1 = jax.random.uniform(k2, (HID_DIM,), jnp.float32, -bound1, bound1)
    w2 = jax.random.uniform(k3, (HID_DIM, OUT_DIM), jnp.float32, -bound2, bound2)
    b2 = jax.random.uniform(k4, (OUT_DIM,), jnp.float32, -bound2, bound2)
    return w1, b1, w2, b2


def reference_forward(x, w1, b1, w2, b2):
    h = jnp.maximum(x @ w1 + b1, 0.0)
    return h @ w2 + b2


if __name__ == "__main__":
    key = jax.random.PRNGKey(0)
    kx, kx2, kp = jax.random.split(key, 3)
    w1, b1, w2, b2 = init_params(kp)

    # Case 1: tiny batch, not a multiple of the tile -> exercises padding path.
    B1 = 10
    x1 = jax.random.normal(kx, (B1, IN_DIM), jnp.float32)
    out1 = jax.block_until_ready(encoder_forward(x1, w1, b1, w2, b2))
    ref1 = reference_forward(x1, w1, b1, w2, b2)
    assert out1.shape == (B1, OUT_DIM), out1.shape
    assert jnp.allclose(out1, ref1, atol=1e-4, rtol=1e-4), "mismatch vs reference (B=10)"

    # Case 2: multi-tile grid (small block to keep the test small/fast).
    B2 = 192
    x2 = jax.random.normal(kx2, (B2, IN_DIM), jnp.float32)
    out2 = jax.block_until_ready(encoder_forward(x2, w1, b1, w2, b2, block_b=64))
    ref2 = reference_forward(x2, w1, b1, w2, b2)
    assert out2.shape == (B2, OUT_DIM), out2.shape
    assert jnp.allclose(out2, ref2, atol=1e-4, rtol=1e-4), "mismatch vs reference (B=192)"

    print("KERNEL_OK")
</pallas_src>

<mosaic_0001>
module attributes {stable_mosaic.version = 11 : i64} {
  func.func @encoder_kernel(%arg0: i32, %arg1: memref<16x784xf32, #tpu.memory_space<vmem>>, %arg2: memref<784x64xf32, #tpu.memory_space<vmem>>, %arg3: memref<1x64xf32, #tpu.memory_space<vmem>>, %arg4: memref<64x128xf32, #tpu.memory_space<vmem>>, %arg5: memref<1x128xf32, #tpu.memory_space<vmem>>, %arg6: memref<16x128xf32, #tpu.memory_space<vmem>>) attributes {dimension_semantics = [#tpu.dimension_semantics<parallel>], iteration_bounds = array<i64: 1>, scalar_prefetch = 0 : i64, scratch_operands = 0 : i64, tpu.core_type = #tpu.core_type<tc>, window_params = [{transform_indices = @transform_0, window_bounds = array<i64: 16, 784>}, {pipeline_mode = #tpu.pipeline_mode<synchronous>, transform_indices = @transform_1, window_bounds = array<i64: 784, 64>}, {pipeline_mode = #tpu.pipeline_mode<synchronous>, transform_indices = @transform_2, window_bounds = array<i64: 1, 64>}, {pipeline_mode = #tpu.pipeline_mode<synchronous>, transform_indices = @transform_3, window_bounds = array<i64: 64, 128>}, {pipeline_mode = #tpu.pipeline_mode<synchronous>, transform_indices = @transform_4, window_bounds = array<i64: 1, 128>}, {transform_indices = @transform_5, window_bounds = array<i64: 16, 128>}]} {
    %c0 = arith.constant 0 : index
    %c0_0 = arith.constant 0 : index
    %0 = vector.load %arg1[%c0, %c0_0] : memref<16x784xf32, #tpu.memory_space<vmem>>, vector<16x784xf32>
    %c0_1 = arith.constant 0 : index
    %c0_2 = arith.constant 0 : index
    %1 = vector.load %arg2[%c0_1, %c0_2] : memref<784x64xf32, #tpu.memory_space<vmem>>, vector<784x64xf32>
    %cst = arith.constant dense<0.000000e+00> : vector<16x64xf32>
    %2 = tpu.matmul %0, %1, %cst {dimension_numbers = #tpu.dot_dimension_numbers<[1], [0], [0], [1], [0, 0, 1, 1], [], []>} : vector<16x784xf32>, vector<784x64xf32>, vector<16x64xf32> -> vector<16x64xf32>
    %c0_3 = arith.constant 0 : index
    %c0_4 = arith.constant 0 : index
    %3 = vector.load %arg3[%c0_3, %c0_4] : memref<1x64xf32, #tpu.memory_space<vmem>>, vector<1x64xf32>
    %4 = vector.broadcast %3 : vector<1x64xf32> to vector<16x64xf32>
    %5 = arith.addf %2, %4 : vector<16x64xf32>
    %cst_5 = arith.constant 0.000000e+00 : f32
    %6 = vector.broadcast %cst_5 : f32 to vector<16x64xf32>
    %7 = arith.maximumf %5, %6 : vector<16x64xf32>
    %c0_6 = arith.constant 0 : index
    %c0_7 = arith.constant 0 : index
    %8 = vector.load %arg4[%c0_6, %c0_7] : memref<64x128xf32, #tpu.memory_space<vmem>>, vector<64x128xf32>
    %cst_8 = arith.constant dense<0.000000e+00> : vector<16x128xf32>
    %9 = tpu.matmul %7, %8, %cst_8 {dimension_numbers = #tpu.dot_dimension_numbers<[1], [0], [0], [1], [0, 0, 1, 1], [], []>} : vector<16x64xf32>, vector<64x128xf32>, vector<16x128xf32> -> vector<16x128xf32>
    %c0_9 = arith.constant 0 : index
    %c0_10 = arith.constant 0 : index
    %10 = vector.load %arg5[%c0_9, %c0_10] : memref<1x128xf32, #tpu.memory_space<vmem>>, vector<1x128xf32>
    %11 = vector.broadcast %10 : vector<1x128xf32> to vector<16x128xf32>
    %12 = arith.addf %9, %11 : vector<16x128xf32>
    %c0_11 = arith.constant 0 : index
    %c0_12 = arith.constant 0 : index
    %13 = vector.load %arg6[%c0_11, %c0_12] : memref<16x128xf32, #tpu.memory_space<vmem>>, vector<16x128xf32>
    tpu.vector_store %arg6[%c0_11, %c0_12], %12 {strides = array<i32>} : memref<16x128xf32, #tpu.memory_space<vmem>>, vector<16x128xf32>,
    return
  }
  func.func @transform_0(%arg0: i32) -> (i32, i32) {
    %c0_i32 = arith.constant 0 : i32
    %c0_i32_0 = arith.constant 0 : i32
    return %arg0, %c0_i32 : i32, i32
  }
  func.func @transform_1(%arg0: i32) -> (i32, i32) {
    %c0_i32 = arith.constant 0 : i32
    %c0_i32_0 = arith.constant 0 : i32
    %c0_i32_1 = arith.constant 0 : i32
    return %c0_i32, %c0_i32_0 : i32, i32
  }
  func.func @transform_2(%arg0: i32) -> (i32, i32) {
    %c0_i32 = arith.constant 0 : i32
    %c0_i32_0 = arith.constant 0 : i32
    %c0_i32_1 = arith.constant 0 : i32
    return %c0_i32, %c0_i32_0 : i32, i32
  }
  func.func @transform_3(%arg0: i32) -> (i32, i32) {
    %c0_i32 = arith.constant 0 : i32
    %c0_i32_0 = arith.constant 0 : i32
    %c0_i32_1 = arith.constant 0 : i32
    return %c0_i32, %c0_i32_0 : i32, i32
  }
  func.func @transform_4(%arg0: i32) -> (i32, i32) {
    %c0_i32 = arith.constant 0 : i32
    %c0_i32_0 = arith.constant 0 : i32
    %c0_i32_1 = arith.constant 0 : i32
    return %c0_i32, %c0_i32_0 : i32, i32
  }
  func.func @transform_5(%arg0: i32) -> (i32, i32) {
    %c0_i32 = arith.constant 0 : i32
    %c0_i32_0 = arith.constant 0 : i32
    return %arg0, %c0_i32 : i32, i32
  }
}

</mosaic_0001>

<llo_original>
// kernel: tpu_custom_call.1
$region0: #{tpu_custom_call.1}
  #allocation0 [shape = 'u32[]', space=smem, size = 0x4, offset = 0x4, fixed_abs, tag = 'smem constant byte address 0x4 - core index']
  #allocation1 [shape = 'u32[144,128]{1,0:T(1,128)}', space=vmem, size = 0x12000, scoped, tag = 'internal scratch']
  %s0 = inlined_call_operand.vmem [shape: f32[16,784], index: 0, kind: input, shape index: {}]
  %s1 = inlined_call_operand.vmem [shape: f32[784,64], index: 1, kind: input, shape index: {}]
  %s2 = inlined_call_operand.vmem [shape: f32[1,64], index: 2, kind: input, shape index: {}]
  %s3 = inlined_call_operand.vmem [shape: f32[64,128], index: 3, kind: input, shape index: {}]
  %s4 = inlined_call_operand.vmem [shape: f32[1,128], index: 4, kind: input, shape index: {}]
  %s5 = inlined_call_operand.hbm [shape: f32[16,128], index: 5, kind: output, shape index: {}]
  %s6 = sld [smem:[#allocation0]]
  $region30: #{tpu_custom_call.1} parent=0
    _
  %s8 = ssub.s32 1, %s6
  %s9 = scalar_select 0, %s8, %s6
  $region1: #{tpu_custom_call.1} parent=0
    #allocation2 [shape = 'u8[8192]{0}', space=vmem, size = 0x2000, scoped, tag = 'output window, operand 0, single buffered']
    #allocation3 [shape = 's32[1]{0}', space=sflag, size = 0x4, scoped, tag = 'scoped memory for tpu_custom_call.1']
    %10 = vsyncpa [#allocation3], 0
    // Predicated region
    $region2: #{tpu_custom_call.1} parent=1 // pred_check
      _
    $region3: #{tpu_custom_call.1} parent=1 // pred_check_branch
      %12 = sbr.rel (0) target = $region5
    $region4: #{tpu_custom_call.1} parent=1 // pred_region
      _
    $region5: #{tpu_custom_call.1} parent=1 // pred_fallthru
      _
    // Predicated region
    $region6: #{tpu_custom_call.1} parent=1 // pred_check
      _
    $region7: #{tpu_custom_call.1} parent=1 // pred_check_branch
      %14 = sbr.rel (0) target = $region9
    $region8: #{tpu_custom_call.1} parent=1 // pred_region
      _
    $region9: #{tpu_custom_call.1} parent=1 // pred_fallthru
      _
    // Predicated region
    $region10: #{tpu_custom_call.1} parent=1 // pred_check
      _
    $region11: #{tpu_custom_call.1} parent=1 // pred_check_branch
      %16 = sbr.rel (0) target = $region13
    $region12: #{tpu_custom_call.1} parent=1 // pred_region
      _
    $region13: #{tpu_custom_call.1} parent=1 // pred_fallthru
      _
    // Predicated region
    $region14: #{tpu_custom_call.1} parent=1 // pred_check
      _
    $region15: #{tpu_custom_call.1} parent=1 // pred_check_branch
      %18 = sbr.rel (0) target = $region17
    $region16: #{tpu_custom_call.1} parent=1 // pred_region
      _
    $region17: #{tpu_custom_call.1} parent=1 // pred_fallthru
      _
    // Predicated region
    $region18: #{tpu_custom_call.1} parent=1 // pred_check
      _
    $region19: #{tpu_custom_call.1} parent=1 // pred_check_branch
      %20 = sbr.rel (0) target = $region21
    $region20: #{tpu_custom_call.1} parent=1 // pred_region
      _
    $region21: #{tpu_custom_call.1} parent=1 // pred_fallthru
      _
    %v21 = vld [vmem:[%s0] sm:$0xff]
    %v22 = vld [vmem:[%s0 + $0x8] sm:$0xff]
    %v23 = vld [vmem:[%s0 + $0x10] sm:$0xff]
    %v24 = vld [vmem:[%s0 + $0x18] sm:$0xff]
    %v25 = vld [vmem:[%s0 + $0x20] sm:$0xff]
    %v26 = vld [vmem:[%s0 + $0x28] sm:$0xff]
    %v27 = vld [vmem:[%s0 + $0x30] sm:$0xff]
    %v28 = vld [vmem:[%s0 + $0x38] sm:$0xff]
    %v29 = vld [vmem:[%s0 + $0x40] sm:$0xff]
    %v30 = vld [vmem:[%s0 + $0x48] sm:$0xff]
    %v31 = vld [vmem:[%s0 + $0x50] sm:$0xff]
    %v32 = vld [vmem:[%s0 + $0x58] sm:$0xff]
    %v33 = vld [vmem:[%s0 + $0x60] sm:$0xff]
    %v34 = vld [vmem:[%s0 + $0x68] sm:$0xff]
    %v35 = vld [vmem:[%s1] sm:$0xff]
    %v36 = vld [vmem:[%s1 + $0x8] sm:$0xff]
    %v37 = vld [vmem:[%s1 + $0x10] sm:$0xff]
    %v38 = vld [vmem:[%s1 + $0x18] sm:$0xff]
    %v39 = vld [vmem:[%s1 + $0x20] sm:$0xff]
    %v40 = vld [vmem:[%s1 + $0x28] sm:$0xff]
    %v41 = vld [vmem:[%s1 + $0x30] sm:$0xff]
    %v42 = vld [vmem:[%s1 + $0x38] sm:$0xff]
    %v43 = vld [vmem:[%s1 + $0x40] sm:$0xff]
    %v44 = vld [vmem:[%s1 + $0x48] sm:$0xff]
    %v45 = vld [vmem:[%s1 + $0x50] sm:$0xff]
    %v46 = vld [vmem:[%s1 + $0x58] sm:$0xff]
    %v47 = vld [vmem:[%s1 + $0x60] sm:$0xff]
    %v48 = vld [vmem:[%s1 + $0x68] sm:$0xff]
    %v49 = vld [vmem:[%s1 + $0x70] sm:$0xff]
    %v50 = vld [vmem:[%s1 + $0x78] sm:$0xff]
    %v51 = vld [vmem:[%s1 + $0x80] sm:$0xff]
    %v52 = vld [vmem:[%s1 + $0x88] sm:$0xff]
    %v53 = vld [vmem:[%s1 + $0x90] sm:$0xff]
    %v54 = vld [vmem:[%s1 + $0x98] sm:$0xff]
    %v55 = vld [vmem:[%s1 + $0xa0] sm:$0xff]
    %v56 = vld [vmem:[%s1 + $0xa8] sm:$0xff]
    %v57 = vld [vmem:[%s1 + $0xb0] sm:$0xff]
    %v58 = vld [vmem:[%s1 + $0xb8] sm:$0xff]
    %v59 = vld [vmem:[%s1 + $0xc0] sm:$0xff]
    %v60 = vld [vmem:[%s1 + $0xc8] sm:$0xff]
    %v61 = vld [vmem:[%s1 + $0xd0] sm:$0xff]
    %v62 = vld [vmem:[%s1 + $0xd8] sm:$0xff]
    %v63 = vld [vmem:[%s1 + $0xe0] sm:$0xff]
    %v64 = vld [vmem:[%s1 + $0xe8] sm:$0xff]
    %v65 = vld [vmem:[%s1 + $0xf0] sm:$0xff]
    %v66 = vld [vmem:[%s1 + $0xf8] sm:$0xff]
    %v67 = vld [vmem:[%s1 + $0x100] sm:$0xff]
    %v68 = vld [vmem:[%s1 + $0x108] sm:$0xff]
    %v69 = vld [vmem:[%s1 + $0x110] sm:$0xff]
    %v70 = vld [vmem:[%s1 + $0x118] sm:$0xff]
    %v71 = vld [vmem:[%s1 + $0x120] sm:$0xff]
    %v72 = vld [vmem:[%s1 + $0x128] sm:$0xff]
    %v73 = vld [vmem:[%s1 + $0x130] sm:$0xff]
    %v74 = vld [vmem:[%s1 + $0x138] sm:$0xff]
    %v75 = vld [vmem:[%s1 + $0x140] sm:$0xff]
    %v76 = vld [vmem:[%s1 + $0x148] sm:$0xff]
    %v77 = vld [vmem:[%s1 + $0x150] sm:$0xff]
    %v78 = vld [vmem:[%s1 + $0x158] sm:$0xff]
    %v79 = vld [vmem:[%s1 + $0x160] sm:$0xff]
    %v80 = vld [vmem:[%s1 + $0x168] sm:$0xff]
    %v81 = vld [vmem:[%s1 + $0x170] sm:$0xff]
    %v82 = vld [vmem:[%s1 + $0x178] sm:$0xff]
    %v83 = vld [vmem:[%s1 + $0x180] sm:$0xff]
    %v84 = vld [vmem:[%s1 + $0x188] sm:$0xff]
    %v85 = vld [vmem:[%s1 + $0x190] sm:$0xff]
    %v86 = vld [vmem:[%s1 + $0x198] sm:$0xff]
    %v87 = vld [vmem:[%s1 + $0x1a0] sm:$0xff]
    %v88 = vld [vmem:[%s1 + $0x1a8] sm:$0xff]
    %v89 = vld [vmem:[%s1 + $0x1b0] sm:$0xff]
    %v90 = vld [vmem:[%s1 + $0x1b8] sm:$0xff]
    %v91 = vld [vmem:[%s1 + $0x1c0] sm:$0xff]
    %v92 = vld [vmem:[%s1 + $0x1c8] sm:$0xff]
    %v93 = vld [vmem:[%s1 + $0x1d0] sm:$0xff]
    %v94 = vld [vmem:[%s1 + $0x1d8] sm:$0xff]
    %v95 = vld [vmem:[%s1 + $0x1e0] sm:$0xff]
    %v96 = vld [vmem:[%s1 + $0x1e8] sm:$0xff]
    %v97 = vld [vmem:[%s1 + $0x1f0] sm:$0xff]
    %v98 = vld [vmem:[%s1 + $0x1f8] sm:$0xff]
    %v99 = vld [vmem:[%s1 + $0x200] sm:$0xff]
    %v100 = vld [vmem:[%s1 + $0x208] sm:$0xff]
    %v101 = vld [vmem:[%s1 + $0x210] sm:$0xff]
    %v102 = vld [vmem:[%s1 + $0x218] sm:$0xff]
    %v103 = vld [vmem:[%s1 + $0x220] sm:$0xff]
    %v104 = vld [vmem:[%s1 + $0x228] sm:$0xff]
    %v105 = vld [vmem:[%s1 + $0x230] sm:$0xff]
    %v106 = vld [vmem:[%s1 + $0x238] sm:$0xff]
    %v107 = vld [vmem:[%s1 + $0x240] sm:$0xff]
    %v108 = vld [vmem:[%s1 + $0x248] sm:$0xff]
    %v109 = vld [vmem:[%s1 + $0x250] sm:$0xff]
    %v110 = vld [vmem:[%s1 + $0x258] sm:$0xff]
    %v111 = vld [vmem:[%s1 + $0x260] sm:$0xff]
    %v112 = vld [vmem:[%s1 + $0x268] sm:$0xff]
    %v113 = vld [vmem:[%s1 + $0x270] sm:$0xff]
    %v114 = vld [vmem:[%s1 + $0x278] sm:$0xff]
    %v115 = vld [vmem:[%s1 + $0x280] sm:$0xff]
    %v116 = vld [vmem:[%s1 + $0x288] sm:$0xff]
    %v117 = vld [vmem:[%s1 + $0x290] sm:$0xff]
    %v118 = vld [vmem:[%s1 + $0x298] sm:$0xff]
    %v119 = vld [vmem:[%s1 + $0x2a0] sm:$0xff]
    %v120 = vld [vmem:[%s1 + $0x2a8] sm:$0xff]
    %v121 = vld [vmem:[%s1 + $0x2b0] sm:$0xff]
    %v122 = vld [vmem:[%s1 + $0x2b8] sm:$0xff]
    %v123 = vld [vmem:[%s1 + $0x2c0] sm:$0xff]
    %v124 = vld [vmem:[%s1 + $0x2c8] sm:$0xff]
    %v125 = vld [vmem:[%s1 + $0x2d0] sm:$0xff]
    %v126 = vld [vmem:[%s1 + $0x2d8] sm:$0xff]
    %v127 = vld [vmem:[%s1 + $0x2e0] sm:$0xff]
    %v128 = vld [vmem:[%s1 + $0x2e8] sm:$0xff]
    %v129 = vld [vmem:[%s1 + $0x2f0] sm:$0xff]
    %v130 = vld [vmem:[%s1 + $0x2f8] sm:$0xff]
    %v131 = vld [vmem:[%s1 + $0x300] sm:$0xff]
    %v132 = vld [vmem:[%s1 + $0x308] sm:$0xff]
    %v133 = vld [vmem:[%s2] sm:$0x1]
    %v135 = vlaneseq
    %v136 = vshrl.u32 %v135, 7
    %v137 = vsub.s32 0, %v136
    %v138 = vrot.slane %v133, %v137
    %vm140 = vcmask 130048
    %v142 = vsel %vm140, %v27, 0
    %v145 = vsel %vm140, %v34, 0
    %147 = vmatprep.subr.mxu0 0.0
    %148 = vmatpush1.msra.mxu0 %v35
    %149 = vmatprep.subr.mxu0 0.0
    %150 = vmatpush1.msra.mxu0 %v36
    %151 = vmatprep.subr.mxu0 0.0
    %152 = vmatpush1.msra.mxu0 %v37
    %153 = vmatprep.subr.mxu0 0.0
    %154 = vmatpush1.msra.mxu0 %v38
    %155 = vmatprep.subr.mxu0 0.0
    %156 = vmatpush1.msra.mxu0 %v39
    %157 = vmatprep.subr.mxu0 0.0
    %158 = vmatpush1.msra.mxu0 %v40
    %159 = vmatprep.subr.mxu0 0.0
    %160 = vmatpush1.msra.mxu0 %v41
    %161 = vmatprep.subr.mxu0 0.0
    %162 = vmatpush1.msra.mxu0 %v42
    %163 = vmatprep.subr.mxu0 0.0
    %164 = vmatpush1.msra.mxu0 %v43
    %165 = vmatprep.subr.mxu0 0.0
    %166 = vmatpush1.msra.mxu0 %v44
    %167 = vmatprep.subr.mxu0 0.0
    %168 = vmatpush1.msra.mxu0 %v45
    %169 = vmatprep.subr.mxu0 0.0
    %170 = vmatpush1.msra.mxu0 %v46
    %171 = vmatprep.subr.mxu0 0.0
    %172 = vmatpush1.msra.mxu0 %v47
    %173 = vmatprep.subr.mxu0 0.0
    %174 = vmatpush1.msra.mxu0 %v48
    %175 = vmatprep.subr.mxu0 0.0
    %176 = vmatpush1.msra.mxu0 %v49
    %177 = vmatprep.subr.mxu0 0.0
    %178 = vmatpush1.msra.mxu0 %v50
    %179 = vmatprep.subr.mxu0 0.0
    %180 = vmatpush1.msra.mxu0 %v51
    %181 = vmatprep.subr.mxu0 0.0
    %182 = vmatpush1.msra.mxu0 %v52
    %183 = vmatprep.subr.mxu0 0.0
    %184 = vmatpush1.msra.mxu0 %v53
    %185 = vmatprep.subr.mxu0 0.0
    %186 = vmatpush1.msra.mxu0 %v54
    %187 = vmatprep.subr.mxu0 0.0
    %188 = vmatpush1.msra.mxu0 %v55
    %189 = vmatprep.subr.mxu0 0.0
    %190 = vmatpush1.msra.mxu0 %v56
    %191 = vmatprep.subr.mxu0 0.0
    %192 = vmatpush1.msra.mxu0 %v57
    %193 = vmatprep.subr.mxu0 0.0
    %194 = vmatpush1.msra.mxu0 %v58
    %195 = vmatprep.subr.mxu0 0.0
    %196 = vmatpush1.msra.mxu0 %v59
    %197 = vmatprep.subr.mxu0 0.0
    %198 = vmatpush1.msra.mxu0 %v60
    %199 = vmatprep.subr.mxu0 0.0
    %200 = vmatpush1.msra.mxu0 %v61
    %201 = vmatprep.subr.mxu0 0.0
    %202 = vmatpush1.msra.mxu0 %v62
    %203 = vmatprep.subr.mxu0 0.0
    %204 = vmatpush1.msra.mxu0 %v63
    %205 = vmatprep.subr.mxu0 0.0
    %206 = vmatpush1.msra.mxu0 %v64
    %207 = vmatprep.subr.mxu0 0.0
    %208 = vmatpush1.msra.mxu0 %v65
    %209 = vmatprep.subr.mxu0 0.0
    %210 = vmatpush1.msra.mxu0 %v66
    %211 = vmatprep.mubr.f32.mxu0 %v22
    %212 = vmatmul.mubr.f32.gmra.mrb[0].mxu0 %v21
    %v213 = vpop.f32.mrb[0].mxu0
    %v214 = vadd.f32 %v138, %v213
    %v215 = vpop.f32.mrb[0].mxu0
    %216 = vmatprep.mubr.f32.mxu0 %v29
    %217 = vmatmul.mubr.f32.gmra.mrb[0].mxu0 %v28
    %v218 = vpop.f32.mrb[0].mxu0
    %v219 = vadd.f32 %v138, %v218
    %v220 = vpop.f32.mrb[0].mxu0
    %221 = vdwg.mxu0
    %222 = vmatprep.subr.mxu0 0.0
    %223 = vmatpush1.msra.mxu0 %v67
    %224 = vmatprep.subr.mxu0 0.0
    %225 = vmatpush1.msra.mxu0 %v68
    %226 = vmatprep.subr.mxu0 0.0
    %227 = vmatpush1.msra.mxu0 %v69
    %228 = vmatprep.subr.mxu0 0.0
    %229 = vmatpush1.msra.mxu0 %v70
    %230 = vmatprep.subr.mxu0 0.0
    %231 = vmatpush1.msra.mxu0 %v71
    %232 = vmatprep.subr.mxu0 0.0
    %233 = vmatpush1.msra.mxu0 %v72
    %234 = vmatprep.subr.mxu0 0.0
    %235 = vmatpush1.msra.mxu0 %v73
    %236 = vmatprep.subr.mxu0 0.0
    %237 = vmatpush1.msra.mxu0 %v74
    %238 = vmatprep.subr.mxu0 0.0
    %239 = vmatpush1.msra.mxu0 %v75
    %240 = vmatprep.subr.mxu0 0.0
    %241 = vmatpush1.msra.mxu0 %v76
    %242 = vmatprep.subr.mxu0 0.0
    %243 = vmatpush1.msra.mxu0 %v77
    %244 = vmatprep.subr.mxu0 0.0
    %245 = vmatpush1.msra.mxu0 %v78
    %246 = vmatprep.subr.mxu0 0.0
    %247 = vmatpush1.msra.mxu0 %v79
    %248 = vmatprep.subr.mxu0 0.0
    %249 = vmatpush1.msra.mxu0 %v80
    %250 = vmatprep.subr.mxu0 0.0
    %251 = vmatpush1.msra.mxu0 %v81
    %252 = vmatprep.subr.mxu0 0.0
    %253 = vmatpush1.msra.mxu0 %v82
    %254 = vmatprep.subr.mxu0 0.0
    %255 = vmatpush1.msra.mxu0 %v83
    %256 = vmatprep.subr.mxu0 0.0
    %257 = vmatpush1.msra.mxu0 %v84
    %258 = vmatprep.subr.mxu0 0.0
    %259 = vmatpush1.msra.mxu0 %v85
    %260 = vmatprep.subr.mxu0 0.0
    %261 = vmatpush1.msra.mxu0 %v86
    %262 = vmatprep.subr.mxu0 0.0
    %263 = vmatpush1.msra.mxu0 %v87
    %264 = vmatprep.subr.mxu0 0.0
    %265 = vmatpush1.msra.mxu0 %v88
    %266 = vmatprep.subr.mxu0 0.0
    %267 = vmatpush1.msra.mxu0 %v89
    %268 = vmatprep.subr.mxu0 0.0
    %269 = vmatpush1.msra.mxu0 %v90
    %270 = vmatprep.subr.mxu0 0.0
    %271 = vmatpush1.msra.mxu0 %v91
    %272 = vmatprep.subr.mxu0 0.0
    %273 = vmatpush1.msra.mxu0 %v92
    %274 = vmatprep.subr.mxu0 0.0
    %275 = vmatpush1.msra.mxu0 %v93
    %276 = vmatprep.subr.mxu0 0.0
    %277 = vmatpush1.msra.mxu0 %v94
    %278 = vmatprep.subr.mxu0 0.0
    %279 = vmatpush1.msra.mxu0 %v95
    %280 = vmatprep.subr.mxu0 0.0
    %281 = vmatpush1.msra.mxu0 %v96
    %282 = vmatprep.subr.mxu0 0.0
    %283 = vmatpush1.msra.mxu0 %v97
    %284 = vmatprep.subr.mxu0 0.0
    %285 = vmatpush1.msra.mxu0 %v98
    %286 = vmatprep.mubr.f32.mxu0 %v24
    %287 = vmatmul.mubr.f32.gmra.mrb[0].mxu0 %v23
    %v288 = vpop.f32.mrb[0].mxu0
    %v289 = vadd.f32 %v214, %v288
    %v290 = vpop.f32.mrb[0].mxu0
    %291 = vmatprep.mubr.f32.mxu0 %v31
    %292 = vmatmul.mubr.f32.gmra.mrb[0].mxu0 %v30
    %v293 = vpop.f32.mrb[0].mxu0
    %v294 = vadd.f32 %v219, %v293
    %v295 = vpop.f32.mrb[0].mxu0
    %296 = vdwg.mxu0
    %297 = vmatprep.subr.mxu0 0.0
    %298 = vmatpush1.msra.mxu0 %v99
    %299 = vmatprep.subr.mxu0 0.0
    %300 = vmatpush1.msra.mxu0 %v100
    %301 = vmatprep.subr.mxu0 0.0
    %302 = vmatpush1.msra.mxu0 %v101
    %303 = vmatprep.subr.mxu0 0.0
    %304 = vmatpush1.msra.mxu0 %v102
    %305 = vmatprep.subr.mxu0 0.0
    %306 = vmatpush1.msra.mxu0 %v103
    %307 = vmatprep.subr.mxu0 0.0
    %308 = vmatpush1.msra.mxu0 %v104
    %309 = vmatprep.subr.mxu0 0.0
    %310 = vmatpush1.msra.mxu0 %v105
    %311 = vmatprep.subr.mxu0 0.0
    %312 = vmatpush1.msra.mxu0 %v106
    %313 = vmatprep.subr.mxu0 0.0
    %314 = vmatpush1.msra.mxu0 %v107
    %315 = vmatprep.subr.mxu0 0.0
    %316 = vmatpush1.msra.mxu0 %v108
    %317 = vmatprep.subr.mxu0 0.0
    %318 = vmatpush1.msra.mxu0 %v109
    %319 = vmatprep.subr.mxu0 0.0
    %320 = vmatpush1.msra.mxu0 %v110
    %321 = vmatprep.subr.mxu0 0.0
    %322 = vmatpush1.msra.mxu0 %v111
    %323 = vmatprep.subr.mxu0 0.0
    %324 = vmatpush1.msra.mxu0 %v112
    %325 = vmatprep.subr.mxu0 0.0
    %326 = vmatpush1.msra.mxu0 %v113
    %327 = vmatprep.subr.mxu0 0.0
    %328 = vmatpush1.msra.mxu0 %v114
    %329 = vmatprep.subr.mxu0 0.0
    %330 = vmatpush1.msra.mxu0 %v115
    %331 = vmatprep.subr.mxu0 0.0
    %332 = vmatpush1.msra.mxu0 %v116
    %333 = vmatprep.subr.mxu0 0.0
    %334 = vmatpush1.msra.mxu0 %v117
    %335 = vmatprep.subr.mxu0 0.0
    %336 = vmatpush1.msra.mxu0 %v118
    %337 = vmatprep.subr.mxu0 0.0
    %338 = vmatpush1.msra.mxu0 %v119
    %339 = vmatprep.subr.mxu0 0.0
    %340 = vmatpush1.msra.mxu0 %v120
    %341 = vmatprep.subr.mxu0 0.0
    %342 = vmatpush1.msra.mxu0 %v121
    %343 = vmatprep.subr.mxu0 0.0
    %344 = vmatpush1.msra.mxu0 %v122
    %345 = vmatprep.subr.mxu0 0.0
    %346 = vmatpush1.msra.mxu0 %v123
    %347 = vmatprep.subr.mxu0 0.0
    %348 = vmatpush1.msra.mxu0 %v124
    %349 = vmatprep.subr.mxu0 0.0
    %350 = vmatpush1.msra.mxu0 %v125
    %351 = vmatprep.subr.mxu0 0.0
    %352 = vmatpush1.msra.mxu0 %v126
    %353 = vmatprep.subr.mxu0 0.0
    %354 = vmatpush1.msra.mxu0 %v127
    %355 = vmatprep.subr.mxu0 0.0
    %356 = vmatpush1.msra.mxu0 %v128
    %357 = vmatprep.subr.mxu0 0.0
    %358 = vmatpush1.msra.mxu0 %v129
    %359 = vmatprep.subr.mxu0 0.0
    %360 = vmatpush1.msra.mxu0 %v130
    %361 = vmatprep.mubr.f32.mxu0 %v26
    %362 = vmatmul.mubr.f32.gmra.mrb[0].mxu0 %v25
    %v363 = vpop.f32.mrb[0].mxu0
    %v364 = vadd.f32 %v289, %v363
    %v365 = vpop.f32.mrb[0].mxu0
    %366 = vmatprep.mubr.f32.mxu0 %v33
    %367 = vmatmul.mubr.f32.gmra.mrb[0].mxu0 %v32
    %v368 = vpop.f32.mrb[0].mxu0
    %v369 = vadd.f32 %v294, %v368
    %v370 = vpop.f32.mrb[0].mxu0
    %371 = vdwg.mxu0
    %372 = vmatprep.subr.mxu0 0.0
    %373 = vmatpush1.msra.mxu0 %v131
    %374 = vmatprep.subr.mxu0 0.0
    %375 = vmatpush1.msra.mxu0 %v132
    %376 = vmatprep.subr.mxu0 0.0
    %377 = vmatpush1.msra.mxu0 0.0
    %378 = vmatprep.subr.mxu0 0.0
    %379 = vmatpush1.msra.mxu0 0.0
    %380 = vmatprep.subr.mxu0 0.0
    %381 = vmatpush1.msra.mxu0 0.0
    %382 = vmatprep.subr.mxu0 0.0
    %383 = vmatpush1.msra.mxu0 0.0
    %384 = vmatprep.subr.mxu0 0.0
    %385 = vmatpush1.msra.mxu0 0.0
    %386 = vmatprep.subr.mxu0 0.0
    %387 = vmatpush1.msra.mxu0 0.0
    %388 = vmatprep.subr.mxu0 0.0
    %389 = vmatpush1.msra.mxu0 0.0
    %390 = vmatprep.subr.mxu0 0.0
    %391 = vmatpush1.msra.mxu0 0.0
    %392 = vmatprep.subr.mxu0 0.0
    %393 = vmatpush1.msra.mxu0 0.0
    %394 = vmatprep.subr.mxu0 0.0
    %395 = vmatpush1.msra.mxu0 0.0
    %396 = vmatprep.subr.mxu0 0.0
    %397 = vmatpush1.msra.mxu0 0.0
    %398 = vmatprep.subr.mxu0 0.0
    %399 = vmatpush1.msra.mxu0 0.0
    %400 = vmatprep.subr.mxu0 0.0
    %401 = vmatpush1.msra.mxu0 0.0
    %402 = vmatprep.subr.mxu0 0.0
    %403 = vmatpush1.msra.mxu0 0.0
    %404 = vmatprep.subr.mxu0 0.0
    %405 = vmatpush1.msra.mxu0 0.0
    %406 = vmatprep.subr.mxu0 0.0
    %407 = vmatpush1.msra.mxu0 0.0
    %408 = vmatprep.subr.mxu0 0.0
    %409 = vmatpush1.msra.mxu0 0.0
    %410 = vmatprep.subr.mxu0 0.0
    %411 = vmatpush1.msra.mxu0 0.0
    %412 = vmatprep.subr.mxu0 0.0
    %413 = vmatpush1.msra.mxu0 0.0
    %414 = vmatprep.subr.mxu0 0.0
    %415 = vmatpush1.msra.mxu0 0.0
    %416 = vmatprep.subr.mxu0 0.0
    %417 = vmatpush1.msra.mxu0 0.0
    %418 = vmatprep.subr.mxu0 0.0
    %419 = vmatpush1.msra.mxu0 0.0
    %420 = vmatprep.subr.mxu0 0.0
    %421 = vmatpush1.msra.mxu0 0.0
    %422 = vmatprep.subr.mxu0 0.0
    %423 = vmatpush1.msra.mxu0 0.0
    %424 = vmatprep.subr.mxu0 0.0
    %425 = vmatpush1.msra.mxu0 0.0
    %426 = vmatprep.subr.mxu0 0.0
    %427 = vmatpush1.msra.mxu0 0.0
    %428 = vmatprep.subr.mxu0 0.0
    %429 = vmatpush1.msra.mxu0 0.0
    %430 = vmatprep.subr.mxu0 0.0
    %431 = vmatpush1.msra.mxu0 0.0
    %432 = vmatprep.subr.mxu0 0.0
    %433 = vmatpush1.msra.mxu0 0.0
    %434 = vmatprep.subr.mxu0 0.0
    %435 = vmatpush1.msra.mxu0 0.0
    %436 = vmatprep.mubr.f32.mxu0 0.0
    %437 = vmatmul.mubr.f32.gmra.mrb[0].mxu0 %v142
    %v438 = vpop.f32.mrb[0].mxu0
    %v439 = vadd.f32 %v364, %v438
    %v440 = vpop.f32.mrb[0].mxu0
    %441 = vmatprep.mubr.f32.mxu0 0.0
    %442 = vmatmul.mubr.f32.gmra.mrb[0].mxu0 %v145
    %v443 = vpop.f32.mrb[0].mxu0
    %v444 = vadd.f32 %v369, %v443
    %v445 = vpop.f32.mrb[0].mxu0
    %446 = vdwg.mxu0
    %v447 = vmax.f32 %v439, 0.0
    %v448 = vmax.f32 %v444, 0.0
    %v449 = vld [vmem:[%s3] sm:$0xff]
    %v450 = vld [vmem:[%s3 + $0x8] sm:$0xff]
    %v451 = vld [vmem:[%s3 + $0x10] sm:$0xff]
    %v452 = vld [vmem:[%s3 + $0x18] sm:$0xff]
    %v453 = vld [vmem:[%s3 + $0x20] sm:$0xff]
    %v454 = vld [vmem:[%s3 + $0x28] sm:$0xff]
    %v455 = vld [vmem:[%s3 + $0x30] sm:$0xff]
    %v456 = vld [vmem:[%s3 + $0x38] sm:$0xff]
    %v457 = vld [vmem:[%s4] sm:$0x1]
    %v459 = vlaneseq
    %v460 = vshrl.u32 %v459, 7
    %v461 = vsub.s32 0, %v460
    %v462 = vrot.slane %v457, %v461
    %vm464 = vcmask 523264
    %v466 = vsel %vm464, %v447, 0
    %v469 = vsel %vm464, %v448, 0
    %471 = vmatprep.subr.mxu0 0.0
    %472 = vmatpush1.msra.mxu0 %v449
    %473 = vmatprep.subr.mxu0 0.0
    %474 = vmatpush1.msra.mxu0 %v450
    %475 = vmatprep.subr.mxu0 0.0
    %476 = vmatpush1.msra.mxu0 %v451
    %477 = vmatprep.subr.mxu0 0.0
    %478 = vmatpush1.msra.mxu0 %v452
    %479 = vmatprep.subr.mxu0 0.0
    %480 = vmatpush1.msra.mxu0 %v453
    %481 = vmatprep.subr.mxu0 0.0
    %482 = vmatpush1.msra.mxu0 %v454
    %483 = vmatprep.subr.mxu0 0.0
    %484 = vmatpush1.msra.mxu0 %v455
    %485 = vmatprep.subr.mxu0 0.0
    %486 = vmatpush1.msra.mxu0 %v456
    %487 = vmatprep.subr.mxu0 0.0
    %488 = vmatpush1.msra.mxu0 0.0
    %489 = vmatprep.subr.mxu0 0.0
    %490 = vmatpush1.msra.mxu0 0.0
    %491 = vmatprep.subr.mxu0 0.0
    %492 = vmatpush1.msra.mxu0 0.0
    %493 = vmatprep.subr.mxu0 0.0
    %494 = vmatpush1.msra.mxu0 0.0
    %495 = vmatprep.subr.mxu0 0.0
    %496 = vmatpush1.msra.mxu0 0.0
    %497 = vmatprep.subr.mxu0 0.0
    %498 = vmatpush1.msra.mxu0 0.0
    %499 = vmatprep.subr.mxu0 0.0
    %500 = vmatpush1.msra.mxu0 0.0
    %501 = vmatprep.subr.mxu0 0.0
    %502 = vmatpush1.msra.mxu0 0.0
    %503 = vmatprep.subr.mxu0 0.0
    %504 = vmatpush1.msra.mxu0 0.0
    %505 = vmatprep.subr.mxu0 0.0
    %506 = vmatpush1.msra.mxu0 0.0
    %507 = vmatprep.subr.mxu0 0.0
    %508 = vmatpush1.msra.mxu0 0.0
    %509 = vmatprep.subr.mxu0 0.0
    %510 = vmatpush1.msra.mxu0 0.0
    %511 = vmatprep.subr.mxu0 0.0
    %512 = vmatpush1.msra.mxu0 0.0
    %513 = vmatprep.subr.mxu0 0.0
    %514 = vmatpush1.msra.mxu0 0.0
    %515 = vmatprep.subr.mxu0 0.0
    %516 = vmatpush1.msra.mxu0 0.0
    %517 = vmatprep.subr.mxu0 0.0
    %518 = vmatpush1.msra.mxu0 0.0
    %519 = vmatprep.subr.mxu0 0.0
    %520 = vmatpush1.msra.mxu0 0.0
    %521 = vmatprep.subr.mxu0 0.0
    %522 = vmatpush1.msra.mxu0 0.0
    %523 = vmatprep.subr.mxu0 0.0
    %524 = vmatpush1.msra.mxu0 0.0
    %525 = vmatprep.subr.mxu0 0.0
    %526 = vmatpush1.msra.mxu0 0.0
    %527 = vmatprep.subr.mxu0 0.0
    %528 = vmatpush1.msra.mxu0 0.0
    %529 = vmatprep.subr.mxu0 0.0
    %530 = vmatpush1.msra.mxu0 0.0
    %531 = vmatprep.subr.mxu0 0.0
    %532 = vmatpush1.msra.mxu0 0.0
    %533 = vmatprep.subr.mxu0 0.0
    %534 = vmatpush1.msra.mxu0 0.0
    %535 = vmatprep.mubr.f32.mxu0 0.0
    %536 = vmatmul.mubr.f32.gmra.mrb[0].mxu0 %v466
    %v537 = vpop.f32.mrb[0].mxu0
    %v538 = vadd.f32 %v462, %v537
    %v539 = vpop.f32.mrb[0].mxu0
    %540 = vmatprep.mubr.f32.mxu0 0.0
    %541 = vmatmul.mubr.f32.gmra.mrb[0].mxu0 %v469
    %v542 = vpop.f32.mrb[0].mxu0
    %v543 = vadd.f32 %v462, %v542
    %v544 = vpop.f32.mrb[0].mxu0
    %545 = vdwg.mxu0
    %546 = vst [vmem:[#allocation2] sm:$0xff] %v538
    %547 = vst [vmem:[#allocation2 + $0x8] sm:$0xff] %v543
    // Predicated region
    $region22: #{tpu_custom_call.1} parent=1 // pred_check
      _
    $region23: #{tpu_custom_call.1} parent=1 // pred_check_branch
      %549 = sbr.rel (0) target = $region25
    $region24: #{tpu_custom_call.1} parent=1 // pred_region
      %s551 = ssub.s32 256, 256
      %552 = vsyncadd [#allocation3], %s551
      %s553 = sshll.u32 [#allocation2], 4
      %s554 = int_to_ptr.vmem [resolvable:$true] %s553
      %559 = dma.vmem_to_hbm [thread:$0]  %s554, 256, %s5, [#allocation3], 128, 128, 8
    $region25: #{tpu_custom_call.1} parent=1 // pred_fallthru
      _
    // Predicated region
    $region26: #{tpu_custom_call.1} parent=1 // pred_check
      _
    $region27: #{tpu_custom_call.1} parent=1 // pred_check_branch
      %561 = sbr.rel (0) target = $region29
    $region28: #{tpu_custom_call.1} parent=1 // pred_region
      %562 = dma.done [#allocation3], 256
    $region29: #{tpu_custom_call.1} parent=1 // pred_fallthru
      _
    %563 = vsyncpa [#allocation3], 1

</llo_original>
